<compile_context>
chip_gen: v7x
topology: tpu7x:2x2x1
jax: 0.10.0
libtpu: 0.0.40
codegen_flags: <defaults>
</compile_context>

<pallas_src>
import functools

import jax
import jax.numpy as jnp
from jax.experimental import pallas as pl
from jax.experimental.pallas import tpu as pltpu

LANE = 128


def _round_up(x, m):
    return ((x + m - 1) // m) * m


def _vmem_budget_bytes():
    # ~3/4 of physical VMEM: ~96 MiB on v5e/v6e (128 MiB), 48 MiB on v7x (64 MiB).
    try:
        cap = int(pltpu.get_tpu_info().vmem_capacity_bytes)
    except Exception:
        cap = 64 * 1024 * 1024          # conservative (v7x-sized) fallback
    return (cap * 3) // 4


def _pick_tile_m(M, H, in_dsz, budget):
    """Row-tile size from the actual double-buffered per-step VMEM footprint."""
    if M <= LANE:
        return _round_up(M, 8)

    def per_step_bytes(t):
        # two pipeline buffers for each streamed block
        return 2 * (2 * t * H * in_dsz      # x_view tile + x_sent tile
                    + t * 512               # mask_view (t,1): lane-padded f32
                    + 32 * t                # mask_sent (1,t): sublane-padded f32
                    + t * LANE * 4)         # token-output tile (lane-padded f32)

    # TODO(synk): cap at 512 on v5e — per-step overhead is already hidden there
    # and the extra VMEM is better left as headroom.
    cap = min(1024, _round_up(M, LANE))
    tile = LANE
    while 2 * tile <= cap and per_step_bytes(2 * tile) + (4 << 20) <= budget:
        tile *= 2
    return tile


# ----------------------------------------------------------------------------
# Fused kernel: token head per row tile + streaming masked sentence pooling
# ----------------------------------------------------------------------------
def _union_kernel(xv_ref, mv_ref, wt_ref, bt_ref,
                  xs_ref, ms_ref, wh_ref, bh_ref,
                  ov_ref, oh_ref,
                  pooled_acc, denom_acc, *, seq_len):
    i = pl.program_id(0)
    tile_m = xv_ref.shape[0]
    batch = pooled_acc.shape[0]

    # ---- token path: one lane-dense MXU matmul per row tile, f32 epilogue ---
    logits = jnp.dot(xv_ref[...], wt_ref[...],
                     preferred_element_type=jnp.float32)          # [tile_m, T]
    ov_ref[...] = (logits + bt_ref[...]) * mv_ref[...]

    # ---- sentence path: accumulate masked per-batch sums every step ---------
    @pl.when(i == 0)
    def _():
        pooled_acc[...] = jnp.zeros_like(pooled_acc)
        denom_acc[...] = jnp.zeros_like(denom_acc)

    # Per-tile [B, tile_m] row->batch selection (iota range compare, no div).
    row = i * tile_m + jax.lax.broadcasted_iota(jnp.int32, (batch, tile_m), 1)
    b_idx = jax.lax.broadcasted_iota(jnp.int32, (batch, tile_m), 0)
    lo = b_idx * seq_len
    onehot = jnp.logical_and(row >= lo, row < lo + seq_len).astype(jnp.float32)
    sel = onehot * ms_ref[...]                                    # [B, tile_m] f32

    pooled_acc[...] += jnp.dot(sel.astype(xs_ref.dtype), xs_ref[...],
                               preferred_element_type=jnp.float32)  # [B, H]
    denom_acc[...] += jnp.sum(sel, axis=1, keepdims=True)            # [B, 1]

    # ---- finalize on the last step only (fused [H, 128] head matmul) --------
    @pl.when(i == pl.num_programs(0) - 1)
    def _():
        pooled = pooled_acc[...] / jnp.maximum(denom_acc[...], 1.0)   # [B, H]
        oh_ref[...] = (jnp.dot(pooled, wh_ref[...],
                               preferred_element_type=jnp.float32)
                       + bh_ref[...])                                 # [B, 128]


# ----------------------------------------------------------------------------
# Wrapper: layout prep, one pallas_call, reshape/slice back
# ----------------------------------------------------------------------------
def union_net(params, input_view, mask_view, input_sent, mask_sent,
              *, use_bf16=True):
    B, S, H = input_view.shape
    T = params["w_tok"].shape[1]
    C = params["w_cat"].shape[1]
    P = params["w_pol"].shape[1]
    head_pad = _round_up(C + P, LANE)

    in_dtype = jnp.bfloat16 if use_bf16 else jnp.float32
    in_dsz = 2 if use_bf16 else 4

    # Token head weights (streamed operand dtype); f32 bias for the epilogue.
    w_tok = params["w_tok"].astype(in_dtype)                       # [H, T]
    b_tok = params["b_tok"].reshape(1, T).astype(jnp.float32)      # [1, T]

    # Fused, lane-dense sentence heads (tiny; kept f32 for precision).
    w_heads = jnp.zeros((H, head_pad), jnp.float32)
    w_heads = w_heads.at[:, :C].set(params["w_cat"].astype(jnp.float32))
    w_heads = w_heads.at[:, C:C + P].set(params["w_pol"].astype(jnp.float32))
    b_heads = jnp.zeros((1, head_pad), jnp.float32)
    b_heads = b_heads.at[:, :C].set(params["b_cat"].reshape(1, C))
    b_heads = b_heads.at[:, C:C + P].set(params["b_pol"].reshape(1, P))

    # Collapse (B, S) -> M rows; both streams share the same row tiling.
    M = B * S
    budget = _vmem_budget_bytes()
    tile_m = _pick_tile_m(M, H, in_dsz, budget)
    Mp = _round_up(M, tile_m)
    num_tiles = Mp // tile_m

    xv = input_view.reshape(M, H).astype(in_dtype)
    xs = input_sent.reshape(M, H).astype(in_dtype)
    mv = mask_view.reshape(M, 1).astype(jnp.float32)
    ms = mask_sent.reshape(1, M).astype(jnp.float32)               # lane-oriented
    if Mp > M:
        xv = jnp.pad(xv, ((0, Mp - M), (0, 0)))
        xs = jnp.pad(xs, ((0, Mp - M), (0, 0)))
        mv = jnp.pad(mv, ((0, Mp - M), (0, 0)))
        ms = jnp.pad(ms, ((0, 0), (0, Mp - M)))

    flops = int(2 * Mp * H * T            # token matmul
                + 2 * B * Mp * H          # pooling selection matmul
                + 2 * B * H * head_pad)   # fused head matmul
    bytes_accessed = int(in_dsz * (2 * Mp * H + H * T)
                         + 4 * (2 * Mp + T + H * head_pad + head_pad)
                         + 4 * (Mp * T + B * head_pad))

    kernel = functools.partial(_union_kernel, seq_len=S)

    out_view, out_heads = pl.pallas_call(
        kernel,
        out_shape=(jax.ShapeDtypeStruct((Mp, T), jnp.float32),
                   jax.ShapeDtypeStruct((B, head_pad), jnp.float32)),
        grid_spec=pltpu.PrefetchScalarGridSpec(
            num_scalar_prefetch=0,
            grid=(num_tiles,),
            in_specs=[
                pl.BlockSpec((tile_m, H), lambda i: (i, 0)),       # x_view rows
                pl.BlockSpec((tile_m, 1), lambda i: (i, 0)),       # mask_view rows
                pl.BlockSpec((H, T), lambda i: (0, 0)),            # W_tok (resident)
                pl.BlockSpec((1, T), lambda i: (0, 0)),            # b_tok (resident)
                pl.BlockSpec((tile_m, H), lambda i: (i, 0)),       # x_sent rows
                pl.BlockSpec((1, tile_m), lambda i: (0, i)),       # mask_sent (flat)
                pl.BlockSpec((H, head_pad), lambda i: (0, 0)),     # fused head W
                pl.BlockSpec((1, head_pad), lambda i: (0, 0)),     # fused head b
            ],
            out_specs=[
                pl.BlockSpec((tile_m, T), lambda i: (i, 0)),       # token logits
                pl.BlockSpec((B, head_pad), lambda i: (0, 0)),     # sentence heads
            ],
            scratch_shapes=[
                pltpu.VMEM((B, H), jnp.float32),                   # pooled sums
                pltpu.VMEM((B, 1), jnp.float32),                   # mask counts
            ],
        ),
        # "arbitrary": the pooled-sum scratch is a reduction over the row-tile
        # axis, so this fused form cannot shard that axis across TensorCores.
        compiler_params=pltpu.CompilerParams(
            dimension_semantics=("arbitrary",),
            vmem_limit_bytes=int(max(32 << 20, min(budget, 100 << 20)))),
        cost_estimate=pl.CostEstimate(flops=flops, transcendentals=0,
                                      bytes_accessed=bytes_accessed),
    )(xv, mv, w_tok, b_tok, xs, ms, w_heads, b_heads)

    logits_view = out_view[:M].reshape(B, S, T)
    logits_categories = out_heads[:, :C]
    logits_polarities = out_heads[:, C:C + P]
    return logits_view, logits_categories, logits_polarities


# ----------------------------------------------------------------------------
# Pure-JAX reference for correctness checking
# ----------------------------------------------------------------------------
def union_net_ref(params, input_view, mask_view, input_sent, mask_sent):
    m_v = mask_view.astype(jnp.float32)[..., None]
    logits_view = (jnp.einsum("bsh,ht->bst", input_view, params["w_tok"])
                   + params["b_tok"]) * m_v
    m_s = mask_sent.astype(jnp.float32)[..., None]
    denom = jnp.maximum(jnp.sum(m_s, axis=1), 1.0)
    pooled = jnp.sum(input_sent * m_s, axis=1) / denom
    logits_categories = pooled @ params["w_cat"] + params["b_cat"]
    logits_polarities = pooled @ params["w_pol"] + params["b_pol"]
    B = pooled.shape[0]
    return (logits_view,
            logits_categories.reshape(B, -1),
            logits_polarities.reshape(B, -1))


if __name__ == "__main__":
    B, S, H = 2, 8, 32          # batch, seq, hidden
    T, C, P = 4, 4, 3           # token tags, sentence categories, polarities

    key = jax.random.PRNGKey(0)
    k = jax.random.split(key, 8)

    params = {
        "w_tok": jax.random.normal(k[0], (H, T), jnp.float32) * 0.1,
        "b_tok": jax.random.normal(k[1], (1, T), jnp.float32) * 0.01,
        "w_cat": jax.random.normal(k[2], (H, C), jnp.float32) * 0.1,
        "b_cat": jax.random.normal(k[3], (1, C), jnp.float32) * 0.01,
        "w_pol": jax.random.normal(k[4], (H, P), jnp.float32) * 0.1,
        "b_pol": jax.random.normal(k[5], (1, P), jnp.float32) * 0.01,
    }

    input_view = jax.random.normal(k[6], (B, S, H), jnp.float32)
    input_sent = jax.random.normal(k[7], (B, S, H), jnp.float32)
    # deterministic masks with some padding at the end of each sequence
    mask_view = (jnp.arange(S)[None, :] < jnp.array([S, S - 2])[:, None]
                 ).astype(jnp.float32)
    mask_sent = (jnp.arange(S)[None, :] < jnp.array([S - 1, S - 3])[:, None]
                 ).astype(jnp.float32)

    ref = union_net_ref(params, input_view, mask_view, input_sent, mask_sent)

    # bf16 streaming operands (production path): loose tolerance.
    out = union_net(params, input_view, mask_view, input_sent, mask_sent,
                    use_bf16=True)
    out = jax.block_until_ready(out)
    for o, r in zip(out, ref):
        assert o.shape == r.shape, (o.shape, r.shape)
        assert jnp.allclose(o, r, atol=5e-2, rtol=5e-2)

    # f32 validation mode: tight tolerance.
    out_f32 = union_net(params, input_view, mask_view, input_sent, mask_sent,
                        use_bf16=False)
    out_f32 = jax.block_until_ready(out_f32)
    for o, r in zip(out_f32, ref):
        assert o.shape == r.shape, (o.shape, r.shape)
        assert jnp.allclose(o, r, atol=1e-5, rtol=1e-5)

    print("KERNEL_OK")
</pallas_src>

<mosaic_0001>
module attributes {stable_mosaic.version = 11 : i64} {
  func.func @_union_kernel(%arg0: i32, %arg1: memref<16x32xbf16, #tpu.memory_space<vmem>>, %arg2: memref<16x1xf32, #tpu.memory_space<vmem>>, %arg3: memref<32x4xbf16, #tpu.memory_space<vmem>>, %arg4: memref<1x4xf32, #tpu.memory_space<vmem>>, %arg5: memref<16x32xbf16, #tpu.memory_space<vmem>>, %arg6: memref<1x16xf32, #tpu.memory_space<vmem>>, %arg7: memref<32x128xf32, #tpu.memory_space<vmem>>, %arg8: memref<1x128xf32, #tpu.memory_space<vmem>>, %arg9: memref<16x4xf32, #tpu.memory_space<vmem>>, %arg10: memref<2x128xf32, #tpu.memory_space<vmem>>, %arg11: memref<2x32xf32, #tpu.memory_space<vmem>>, %arg12: memref<2x1xf32, #tpu.memory_space<vmem>>) attributes {dimension_semantics = [#tpu.dimension_semantics<arbitrary>], iteration_bounds = array<i64: 1>, scalar_prefetch = 0 : i64, scratch_operands = 2 : i64, tpu.core_type = #tpu.core_type<tc>, window_params = [{transform_indices = @transform_0, window_bounds = array<i64: 16, 32>}, {transform_indices = @transform_1, window_bounds = array<i64: 16, 1>}, {pipeline_mode = #tpu.pipeline_mode<synchronous>, transform_indices = @transform_2, window_bounds = array<i64: 32, 4>}, {pipeline_mode = #tpu.pipeline_mode<synchronous>, transform_indices = @transform_3, window_bounds = array<i64: 1, 4>}, {transform_indices = @transform_4, window_bounds = array<i64: 16, 32>}, {transform_indices = @transform_5, window_bounds = array<i64: 1, 16>}, {pipeline_mode = #tpu.pipeline_mode<synchronous>, transform_indices = @transform_6, window_bounds = array<i64: 32, 128>}, {pipeline_mode = #tpu.pipeline_mode<synchronous>, transform_indices = @transform_7, window_bounds = array<i64: 1, 128>}, {transform_indices = @transform_8, window_bounds = array<i64: 16, 4>}, {pipeline_mode = #tpu.pipeline_mode<synchronous>, transform_indices = @transform_9, window_bounds = array<i64: 2, 128>}]} {
    %c0 = arith.constant 0 : index
    %c0_0 = arith.constant 0 : index
    %0 = vector.load %arg1[%c0, %c0_0] : memref<16x32xbf16, #tpu.memory_space<vmem>>, vector<16x32xbf16>
    %c0_1 = arith.constant 0 : index
    %c0_2 = arith.constant 0 : index
    %1 = vector.load %arg3[%c0_1, %c0_2] : memref<32x4xbf16, #tpu.memory_space<vmem>>, vector<32x4xbf16>
    %cst = arith.constant dense<0.000000e+00> : vector<16x4xf32>
    %2 = tpu.matmul %0, %1, %cst {dimension_numbers = #tpu.dot_dimension_numbers<[1], [0], [0], [1], [0, 0, 1, 1], [], []>} : vector<16x32xbf16>, vector<32x4xbf16>, vector<16x4xf32> -> vector<16x4xf32>
    %c0_3 = arith.constant 0 : index
    %c0_4 = arith.constant 0 : index
    %3 = vector.load %arg4[%c0_3, %c0_4] : memref<1x4xf32, #tpu.memory_space<vmem>>, vector<1x4xf32>
    %4 = vector.broadcast %3 : vector<1x4xf32> to vector<16x4xf32>
    %5 = arith.addf %2, %4 : vector<16x4xf32>
    %c0_5 = arith.constant 0 : index
    %c0_6 = arith.constant 0 : index
    %6 = vector.load %arg2[%c0_5, %c0_6] : memref<16x1xf32, #tpu.memory_space<vmem>>, vector<16x1xf32>
    %7 = vector.broadcast %6 : vector<16x1xf32> to vector<16x4xf32>
    %8 = arith.mulf %5, %7 : vector<16x4xf32>
    %c0_7 = arith.constant 0 : index
    %c0_8 = arith.constant 0 : index
    %9 = vector.load %arg9[%c0_7, %c0_8] : memref<16x4xf32, #tpu.memory_space<vmem>>, vector<16x4xf32>
    tpu.vector_store %arg9[%c0_7, %c0_8], %8 {strides = array<i32>} : memref<16x4xf32, #tpu.memory_space<vmem>>, vector<16x4xf32>,
    %c0_i32 = arith.constant 0 : i32
    %10 = arith.cmpi eq, %arg0, %c0_i32 : i32
    %11 = arith.extui %10 : i1 to i32
    %c0_i32_9 = arith.constant 0 : i32
    %12 = arith.cmpi ne, %11, %c0_i32_9 : i32
    scf.if %12 {
      %cst_27 = arith.constant 0.000000e+00 : f32
      %44 = vector.broadcast %cst_27 : f32 to vector<2x32xf32>
      %c0_28 = arith.constant 0 : index
      %c0_29 = arith.constant 0 : index
      %45 = vector.load %arg11[%c0_28, %c0_29] : memref<2x32xf32, #tpu.memory_space<vmem>>, vector<2x32xf32>
      tpu.vector_store %arg11[%c0_28, %c0_29], %44 {strides = array<i32>} : memref<2x32xf32, #tpu.memory_space<vmem>>, vector<2x32xf32>,
      %cst_30 = arith.constant 0.000000e+00 : f32
      %46 = vector.broadcast %cst_30 : f32 to vector<2x1xf32>
      %c0_31 = arith.constant 0 : index
      %c0_32 = arith.constant 0 : index
      %47 = vector.load %arg12[%c0_31, %c0_32] : memref<2x1xf32, #tpu.memory_space<vmem>>, vector<2x1xf32>
      tpu.vector_store %arg12[%c0_31, %c0_32], %46 {strides = array<i32>} : memref<2x1xf32, #tpu.memory_space<vmem>>, vector<2x1xf32>,
    } else {
    }
    %c16_i32 = arith.constant 16 : i32
    %13 = arith.muli %arg0, %c16_i32 : i32
    %14 = tpu.iota {dimensions = array<i32: 1>} : vector<2x16xi32>
    %15 = vector.broadcast %13 : i32 to vector<2x16xi32>
    %16 = arith.addi %15, %14 : vector<2x16xi32>
    %17 = tpu.iota {dimensions = array<i32: 0>} : vector<2x16xi32>
    %c8_i32 = arith.constant 8 : i32
    %18 = vector.broadcast %c8_i32 : i32 to vector<2x16xi32>
    %19 = arith.muli %17, %18 : vector<2x16xi32>
    %20 = arith.cmpi sge, %16, %19 : vector<2x16xi32>
    %c8_i32_10 = arith.constant 8 : i32
    %21 = vector.broadcast %c8_i32_10 : i32 to vector<2x16xi32>
    %22 = arith.addi %19, %21 : vector<2x16xi32>
    %23 = arith.cmpi slt, %16, %22 : vector<2x16xi32>
    %24 = arith.andi %20, %23 : vector<2x16xi1>
    %25 = arith.extui %24 : vector<2x16xi1> to vector<2x16xi32>
    %26 = arith.sitofp %25 : vector<2x16xi32> to vector<2x16xf32>
    %c0_11 = arith.constant 0 : index
    %c0_12 = arith.constant 0 : index
    %27 = vector.load %arg6[%c0_11, %c0_12] : memref<1x16xf32, #tpu.memory_space<vmem>>, vector<1x16xf32>
    %28 = vector.broadcast %27 : vector<1x16xf32> to vector<2x16xf32>
    %29 = arith.mulf %26, %28 : vector<2x16xf32>
    %c0_13 = arith.constant 0 : index
    %c0_14 = arith.constant 0 : index
    %30 = vector.load %arg11[%c0_13, %c0_14] : memref<2x32xf32, #tpu.memory_space<vmem>>, vector<2x32xf32>
    %31 = arith.truncf %29 : vector<2x16xf32> to vector<2x16xbf16>
    %c0_15 = arith.constant 0 : index
    %c0_16 = arith.constant 0 : index
    %32 = vector.load %arg5[%c0_15, %c0_16] : memref<16x32xbf16, #tpu.memory_space<vmem>>, vector<16x32xbf16>
    %cst_17 = arith.constant dense<0.000000e+00> : vector<2x32xf32>
    %33 = tpu.matmul %31, %32, %cst_17 {dimension_numbers = #tpu.dot_dimension_numbers<[1], [0], [0], [1], [0, 0, 1, 1], [], []>} : vector<2x16xbf16>, vector<16x32xbf16>, vector<2x32xf32> -> vector<2x32xf32>
    %34 = arith.addf %30, %33 : vector<2x32xf32>
    %c0_18 = arith.constant 0 : index
    %c0_19 = arith.constant 0 : index
    %35 = vector.load %arg11[%c0_18, %c0_19] : memref<2x32xf32, #tpu.memory_space<vmem>>, vector<2x32xf32>
    tpu.vector_store %arg11[%c0_18, %c0_19], %34 {strides = array<i32>} : memref<2x32xf32, #tpu.memory_space<vmem>>, vector<2x32xf32>,
    %c0_20 = arith.constant 0 : index
    %c0_21 = arith.constant 0 : index
    %36 = vector.load %arg12[%c0_20, %c0_21] : memref<2x1xf32, #tpu.memory_space<vmem>>, vector<2x1xf32>
    %cst_22 = arith.constant dense<0.000000e+00> : vector<2xf32>
    %37 = vector.multi_reduction <add>, %29, %cst_22 [1] : vector<2x16xf32> to vector<2xf32>
    %38 = vector.shape_cast %37 : vector<2xf32> to vector<2x1xf32>
    %39 = arith.addf %36, %38 : vector<2x1xf32>
    %c0_23 = arith.constant 0 : index
    %c0_24 = arith.constant 0 : index
    %40 = vector.load %arg12[%c0_23, %c0_24] : memref<2x1xf32, #tpu.memory_space<vmem>>, vector<2x1xf32>
    tpu.vector_store %arg12[%c0_23, %c0_24], %39 {strides = array<i32>} : memref<2x1xf32, #tpu.memory_space<vmem>>, vector<2x1xf32>,
    %c0_i32_25 = arith.constant 0 : i32
    %41 = arith.cmpi eq, %arg0, %c0_i32_25 : i32
    %42 = arith.extui %41 : i1 to i32
    %c0_i32_26 = arith.constant 0 : i32
    %43 = arith.cmpi ne, %42, %c0_i32_26 : i32
    scf.if %43 {
      %c0_27 = arith.constant 0 : index
      %c0_28 = arith.constant 0 : index
      %44 = vector.load %arg11[%c0_27, %c0_28] : memref<2x32xf32, #tpu.memory_space<vmem>>, vector<2x32xf32>
      %c0_29 = arith.constant 0 : index
      %c0_30 = arith.constant 0 : index
      %45 = vector.load %arg12[%c0_29, %c0_30] : memref<2x1xf32, #tpu.memory_space<vmem>>, vector<2x1xf32>
      %cst_31 = arith.constant 1.000000e+00 : f32
      %46 = vector.broadcast %cst_31 : f32 to vector<2x1xf32>
      %47 = arith.maximumf %45, %46 : vector<2x1xf32>
      %48 = vector.broadcast %47 : vector<2x1xf32> to vector<2x32xf32>
      %49 = arith.divf %44, %48 : vector<2x32xf32>
      %c0_32 = arith.constant 0 : index
      %c0_33 = arith.constant 0 : index
      %50 = vector.load %arg7[%c0_32, %c0_33] : memref<32x128xf32, #tpu.memory_space<vmem>>, vector<32x128xf32>
      %cst_34 = arith.constant dense<0.000000e+00> : vector<2x128xf32>
      %51 = tpu.matmul %49, %50, %cst_34 {dimension_numbers = #tpu.dot_dimension_numbers<[1], [0], [0], [1], [0, 0, 1, 1], [], []>} : vector<2x32xf32>, vector<32x128xf32>, vector<2x128xf32> -> vector<2x128xf32>
      %c0_35 = arith.constant 0 : index
      %c0_36 = arith.constant 0 : index
      %52 = vector.load %arg8[%c0_35, %c0_36] : memref<1x128xf32, #tpu.memory_space<vmem>>, vector<1x128xf32>
      %53 = vector.broadcast %52 : vector<1x128xf32> to vector<2x128xf32>
      %54 = arith.addf %51, %53 : vector<2x128xf32>
      %c0_37 = arith.constant 0 : index
      %c0_38 = arith.constant 0 : index
      %55 = vector.load %arg10[%c0_37, %c0_38] : memref<2x128xf32, #tpu.memory_space<vmem>>, vector<2x128xf32>
      tpu.vector_store %arg10[%c0_37, %c0_38], %54 {strides = array<i32>} : memref<2x128xf32, #tpu.memory_space<vmem>>, vector<2x128xf32>,
    } else {
    }
    return
  }
  func.func @transform_0(%arg0: i32) -> (i32, i32) {
    %c0_i32 = arith.constant 0 : i32
    %c0_i32_0 = arith.constant 0 : i32
    return %arg0, %c0_i32 : i32, i32
  }
  func.func @transform_1(%arg0: i32) -> (i32, i32) {
    %c0_i32 = arith.constant 0 : i32
    %c0_i32_0 = arith.constant 0 : i32
    return %arg0, %c0_i32 : i32, i32
  }
  func.func @transform_2(%arg0: i32) -> (i32, i32) {
    %c0_i32 = arith.constant 0 : i32
    %c0_i32_0 = arith.constant 0 : i32
    %c0_i32_1 = arith.constant 0 : i32
    return %c0_i32, %c0_i32_0 : i32, i32
  }
  func.func @transform_3(%arg0: i32) -> (i32, i32) {
    %c0_i32 = arith.constant 0 : i32
    %c0_i32_0 = arith.constant 0 : i32
    %c0_i32_1 = arith.constant 0 : i32
    return %c0_i32, %c0_i32_0 : i32, i32
  }
  func.func @transform_4(%arg0: i32) -> (i32, i32) {
    %c0_i32 = arith.constant 0 : i32
    %c0_i32_0 = arith.constant 0 : i32
    return %arg0, %c0_i32 : i32, i32
  }
  func.func @transform_5(%arg0: i32) -> (i32, i32) {
    %c0_i32 = arith.constant 0 : i32
    %c0_i32_0 = arith.constant 0 : i32
    return %c0_i32, %arg0 : i32, i32
  }
  func.func @transform_6(%arg0: i32) -> (i32, i32) {
    %c0_i32 = arith.constant 0 : i32
    %c0_i32_0 = arith.constant 0 : i32
    %c0_i32_1 = arith.constant 0 : i32
    return %c0_i32, %c0_i32_0 : i32, i32
  }
  func.func @transform_7(%arg0: i32) -> (i32, i32) {
    %c0_i32 = arith.constant 0 : i32
    %c0_i32_0 = arith.constant 0 : i32
    %c0_i32_1 = arith.constant 0 : i32
    return %c0_i32, %c0_i32_0 : i32, i32
  }
  func.func @transform_8(%arg0: i32) -> (i32, i32) {
    %c0_i32 = arith.constant 0 : i32
    %c0_i32_0 = arith.constant 0 : i32
    return %arg0, %c0_i32 : i32, i32
  }
  func.func @transform_9(%arg0: i32) -> (i32, i32) {
    %c0_i32 = arith.constant 0 : i32
    %c0_i32_0 = arith.constant 0 : i32
    %c0_i32_1 = arith.constant 0 : i32
    return %c0_i32, %c0_i32_0 : i32, i32
  }
}

</mosaic_0001>

<llo_original>
// kernel: tpu_custom_call.1
$region0: #{tpu_custom_call.1}
  #allocation0 [shape = 'u32[]', space=smem, size = 0x4, offset = 0x4, fixed_abs, tag = 'smem constant byte address 0x4 - core index']
  #allocation1 [shape = 'u32[144,128]{1,0:T(1,128)}', space=vmem, size = 0x12000, scoped, tag = 'internal scratch']
  #allocation2 [shape = 'f32[2,32]{1,0:T(2,128)}', space=vmem, size = 0x400, scoped, tag = 'scratch operand']
  #allocation3 [shape = 'f32[2,1]{1,0:T(2,128)}', space=vmem, size = 0x400, scoped, tag = 'scratch operand']
  %s0 = inlined_call_operand.vmem [shape: bf16[16,32], index: 0, kind: input, shape index: {}]
  %s1 = inlined_call_operand.vmem [shape: f32[16,1], index: 1, kind: input, shape index: {}]
  %s2 = inlined_call_operand.vmem [shape: bf16[32,4], index: 2, kind: input, shape index: {}]
  %s3 = inlined_call_operand.vmem [shape: f32[1,4], index: 3, kind: input, shape index: {}]
  %s4 = inlined_call_operand.vmem [shape: bf16[16,32], index: 4, kind: input, shape index: {}]
  %s5 = inlined_call_operand.vmem [shape: f32[1,16], index: 5, kind: input, shape index: {}]
  %s6 = inlined_call_operand.vmem [shape: f32[32,128], index: 6, kind: input, shape index: {}]
  %s7 = inlined_call_operand.vmem [shape: f32[1,128], index: 7, kind: input, shape index: {}]
  %s8 = inlined_call_operand.vmem [shape: f32[16,4], index: 8, kind: output, shape index: {0}]
  %s9 = inlined_call_operand.hbm [shape: f32[2,128], index: 9, kind: output, shape index: {1}]
  %10 = xla_tuple %s8, %s9
  %s11 = sld [smem:[#allocation0]]
  $region58: #{tpu_custom_call.1} parent=0
    _
  %s13 = ssub.s32 1, %s11
  %s14 = scalar_select 0, %s13, %s11
  $region1: #{tpu_custom_call.1} parent=0
    #allocation4 [shape = 'u8[1024]{0}', space=vmem, size = 0x400, scoped, tag = 'output window, operand 1, single buffered']
    #allocation5 [shape = 's32[1]{0}', space=sflag, size = 0x4, scoped, tag = 'scoped memory for tpu_custom_call.1']
    %15 = vsyncpa [#allocation5], 0
    // Predicated region
    $region2: #{tpu_custom_call.1} parent=1 // pred_check
      _
    $region3: #{tpu_custom_call.1} parent=1 // pred_check_branch
      %17 = sbr.rel (0) target = $region5
    $region4: #{tpu_custom_call.1} parent=1 // pred_region
      _
    $region5: #{tpu_custom_call.1} parent=1 // pred_fallthru
      _
    // Predicated region
    $region6: #{tpu_custom_call.1} parent=1 // pred_check
      _
    $region7: #{tpu_custom_call.1} parent=1 // pred_check_branch
      %19 = sbr.rel (0) target = $region9
    $region8: #{tpu_custom_call.1} parent=1 // pred_region
      _
    $region9: #{tpu_custom_call.1} parent=1 // pred_fallthru
      _
    // Predicated region
    $region10: #{tpu_custom_call.1} parent=1 // pred_check
      _
    $region11: #{tpu_custom_call.1} parent=1 // pred_check_branch
      %21 = sbr.rel (0) target = $region13
    $region12: #{tpu_custom_call.1} parent=1 // pred_region
      _
    $region13: #{tpu_custom_call.1} parent=1 // pred_fallthru
      _
    // Predicated region
    $region14: #{tpu_custom_call.1} parent=1 // pred_check
      _
    $region15: #{tpu_custom_call.1} parent=1 // pred_check_branch
      %23 = sbr.rel (0) target = $region17
    $region16: #{tpu_custom_call.1} parent=1 // pred_region
      _
    $region17: #{tpu_custom_call.1} parent=1 // pred_fallthru
      _
    // Predicated region
    $region18: #{tpu_custom_call.1} parent=1 // pred_check
      _
    $region19: #{tpu_custom_call.1} parent=1 // pred_check_branch
      %25 = sbr.rel (0) target = $region21
    $region20: #{tpu_custom_call.1} parent=1 // pred_region
      _
    $region21: #{tpu_custom_call.1} parent=1 // pred_fallthru
      _
    // Predicated region
    $region22: #{tpu_custom_call.1} parent=1 // pred_check
      _
    $region23: #{tpu_custom_call.1} parent=1 // pred_check_branch
      %27 = sbr.rel (0) target = $region25
    $region24: #{tpu_custom_call.1} parent=1 // pred_region
      _
    $region25: #{tpu_custom_call.1} parent=1 // pred_fallthru
      _
    // Predicated region
    $region26: #{tpu_custom_call.1} parent=1 // pred_check
      _
    $region27: #{tpu_custom_call.1} parent=1 // pred_check_branch
      %29 = sbr.rel (0) target = $region29
    $region28: #{tpu_custom_call.1} parent=1 // pred_region
      _
    $region29: #{tpu_custom_call.1} parent=1 // pred_fallthru
      _
    // Predicated region
    $region30: #{tpu_custom_call.1} parent=1 // pred_check
      _
    $region31: #{tpu_custom_call.1} parent=1 // pred_check_branch
      %31 = sbr.rel (0) target = $region33
    $region32: #{tpu_custom_call.1} parent=1 // pred_region
      _
    $region33: #{tpu_custom_call.1} parent=1 // pred_fallthru
      _
    %v33 = vld [vmem:[%s0] sm:$0xf]
    %v34 = vld [vmem:[%s0 + $0x4] sm:$0xf]
    %v35 = vld [vmem:[%s2] sm:$0xf]
    %v36 = vld [vmem:[%s2 + $0x4] sm:$0xf]
    %v37 = vld [vmem:[%s2 + $0x8] sm:$0xf]
    %v38 = vld [vmem:[%s2 + $0xc] sm:$0xf]
    %v39 = vld [vmem:[%s3] sm:$0x1]
    %v41 = vlaneseq
    %v42 = vshrl.u32 %v41, 7
    %v43 = vsub.s32 0, %v42
    %v44 = vrot.slane %v39, %v43
    %v48 = vunpack.c.l.b16 %v33
    %v49 = vunpack.c.l.b16 %v34
    %v50 = vpack.c.b16 %v49, %v48
    %v55 = vunpack.c.l.b16 %v35
    %v56 = vunpack.c.l.b16 %v36
    %v57 = vunpack.c.l.b16 %v37
    %v58 = vunpack.c.l.b16 %v38
    %v59 = vpack.c.b16 %v56, %v55
    %v60 = vpack.c.b16 %v58, %v57
    %vm63 = vcmask 261120
    %v65 = vsel %vm63, %v50, 0
    %67 = vmatprep.subr.bf16.mxu0 0
    %68 = vmatpush1.bf16.msra.mxu0 %v59
    %69 = vmatprep.subr.bf16.mxu0 0
    %70 = vmatpush1.bf16.msra.mxu0 %v60
    %71 = vmatprep.subr.bf16.mxu0 0
    %72 = vmatpush1.bf16.msra.mxu0 0
    %73 = vmatprep.subr.bf16.mxu0 0
    %74 = vmatpush1.bf16.msra.mxu0 0
    %75 = vmatprep.subr.bf16.mxu0 0
    %76 = vmatpush1.bf16.msra.mxu0 0
    %77 = vmatprep.subr.bf16.mxu0 0
    %78 = vmatpush1.bf16.msra.mxu0 0
    %79 = vmatprep.subr.bf16.mxu0 0
    %80 = vmatpush1.bf16.msra.mxu0 0
    %81 = vmatprep.subr.bf16.mxu0 0
    %82 = vmatpush1.bf16.msra.mxu0 0
    %83 = vmatprep.subr.bf16.mxu0 0
    %84 = vmatpush1.bf16.msra.mxu0 0
    %85 = vmatprep.subr.bf16.mxu0 0
    %86 = vmatpush1.bf16.msra.mxu0 0
    %87 = vmatprep.subr.bf16.mxu0 0
    %88 = vmatpush1.bf16.msra.mxu0 0
    %89 = vmatprep.subr.bf16.mxu0 0
    %90 = vmatpush1.bf16.msra.mxu0 0
    %91 = vmatprep.subr.bf16.mxu0 0
    %92 = vmatpush1.bf16.msra.mxu0 0
    %93 = vmatprep.subr.bf16.mxu0 0
    %94 = vmatpush1.bf16.msra.mxu0 0
    %95 = vmatprep.subr.bf16.mxu0 0
    %96 = vmatpush1.bf16.msra.mxu0 0
    %97 = vmatprep.subr.bf16.mxu0 0
    %98 = vmatpush1.bf16.msra.mxu0 0
    %99 = vmatprep.mubr.bf16.mxu0 0
    %100 = vmatmul.mubr.bf16.gmra.mrb[0].mxu0 %v65
    %v101 = vpop.f32.mrb[0].mxu0
    %v102 = vadd.f32 %v44, %v101
    %v103 = vpop.f32.mrb[0].mxu0
    %v104 = vpop.f32.mrb[0].mxu0
    %v105 = vadd.f32 %v44, %v104
    %v106 = vpop.f32.mrb[0].mxu0
    %107 = vdwg.mxu0
    %v108 = vld [vmem:[%s1] sm:$0xff]
    %v109 = vld [vmem:[%s1 + $0x8] sm:$0xff]
    %111 = vset.pattern.permute.xlu0 0
    %112 = vperm.xlu0 %111, %v108
    %v113 = vpop.permute.xlu0 %112
    %116 = vset.pattern.permute.xlu0 0
    %117 = vperm.xlu0 %116, %v109
    %v118 = vpop.permute.xlu0 %117
    %v120 = vmul.f32 %v102, %v113
    %v121 = vmul.f32 %v105, %v118
    %vm122 = vcmask 31744
    %123 = vst.msk [vmem:[%s8] sm:$0xff] %vm122, %v120
    %124 = vst.msk [vmem:[%s8 + $0x8] sm:$0xff] %vm122, %v121
    %p125 = scmp.eq.s32.totalorder 0, 0
    // Predicated region
    $region34: #{tpu_custom_call.1} parent=1 // pred_check
      %p126 = pneg %p125
    $region35: #{tpu_custom_call.1} parent=1 // pred_check_branch
      %128 = sbr.rel (%p126) target = $region37
    $region36: #{tpu_custom_call.1} parent=1 // pred_region
      %vm129 = vcmask 254976
      %130 = vst.msk [vmem:[#allocation2] sm:$0x3] %vm129, 0.0
      %vm131 = vcmask 1024
      %132 = vst.msk [vmem:[#allocation3] sm:$0x3] %vm131, 0.0
    $region37: #{tpu_custom_call.1} parent=1 // pred_fallthru
      _
    %s133 = smul.u32 0, 16
    %v134 = vlaneseq
    %v135 = vand.u32 %v134, 127
    %v136 = vstv %s133
    %v137 = vadd.s32 %v136, %v135
    %v138 = vlaneseq
    %v139 = vshrl.u32 %v138, 7
    %v140 = vmul.u32 %v139, 8
    %vm141 = vcmp.ge.s32.totalorder %v137, %v140
    %v142 = vadd.s32 %v140, 8
    %vm143 = vcmp.lt.s32.totalorder %v137, %v142
    %vm144 = vmand %vm141, %vm143
    %v145 = vsel %vm144, 1, 0
    %v146 = vcvt.s32.f32 %v145
    %v147 = vld [vmem:[%s5] sm:$0x1]
    %v149 = vlaneseq
    %v150 = vshrl.u32 %v149, 7
    %v151 = vsub.s32 0, %v150
    %v152 = vrot.slane %v147, %v151
    %v154 = vmul.f32 %v146, %v152
    %v155 = vld [vmem:[#allocation2] sm:$0x3]
    %v156 = vpack.c.bf16 %v154, %v154
    %v157 = vld [vmem:[%s4] sm:$0xf]
    %v158 = vld [vmem:[%s4 + $0x4] sm:$0xf]
    %v161 = vunpack.c.l.b16 %v157
    %v162 = vunpack.c.l.b16 %v158
    %v163 = vpack.c.b16 %v162, %v161
    %vm165 = vcmask 130048
    %v167 = vsel %vm165, %v156, 0
    %169 = vmatprep.subr.bf16.mxu0 0
    %170 = vmatpush1.bf16.msra.mxu0 %v163
    %171 = vmatprep.subr.bf16.mxu0 0
    %172 = vmatpush1.bf16.msra.mxu0 0
    %173 = vmatprep.subr.bf16.mxu0 0
    %174 = vmatpush1.bf16.msra.mxu0 0
    %175 = vmatprep.subr.bf16.mxu0 0
    %176 = vmatpush1.bf16.msra.mxu0 0
    %177 = vmatprep.subr.bf16.mxu0 0
    %178 = vmatpush1.bf16.msra.mxu0 0
    %179 = vmatprep.subr.bf16.mxu0 0
    %180 = vmatpush1.bf16.msra.mxu0 0
    %181 = vmatprep.subr.bf16.mxu0 0
    %182 = vmatpush1.bf16.msra.mxu0 0
    %183 = vmatprep.subr.bf16.mxu0 0
    %184 = vmatpush1.bf16.msra.mxu0 0
    %185 = vmatprep.subr.bf16.mxu0 0
    %186 = vmatpush1.bf16.msra.mxu0 0
    %187 = vmatprep.subr.bf16.mxu0 0
    %188 = vmatpush1.bf16.msra.mxu0 0
    %189 = vmatprep.subr.bf16.mxu0 0
    %190 = vmatpush1.bf16.msra.mxu0 0
    %191 = vmatprep.subr.bf16.mxu0 0
    %192 = vmatpush1.bf16.msra.mxu0 0
    %193 = vmatprep.subr.bf16.mxu0 0
    %194 = vmatpush1.bf16.msra.mxu0 0
    %195 = vmatprep.subr.bf16.mxu0 0
    %196 = vmatpush1.bf16.msra.mxu0 0
    %197 = vmatprep.subr.bf16.mxu0 0
    %198 = vmatpush1.bf16.msra.mxu0 0
    %199 = vmatprep.subr.bf16.mxu0 0
    %200 = vmatpush1.bf16.msra.mxu0 0
    %201 = vmatprep.mubr.bf16.mxu0 0
    %202 = vmatmul.mubr.bf16.gmra.mrb[0].mxu0 %v167
    %v203 = vpop.f32.mrb[0].mxu0
    %v204 = vadd.f32 0.0, %v203
    %v205 = vpop.f32.mrb[0].mxu0
    %v206 = vpop.f32.mrb[0].mxu0
    %v207 = vpop.f32.mrb[0].mxu0
    %208 = vdwg.mxu0
    %v209 = vadd.f32 %v155, %v204
    %vm210 = vcmask 254976
    %211 = vst.msk [vmem:[#allocation2] sm:$0x3] %vm210, %v209
    %v212 = vld [vmem:[#allocation3] sm:$0x3]
    %vm213 = vcmask 123904
    %v214 = vsel %vm213, %v154, 0.0
    %215 = vadd.xlane.f32.xlu0 %v214
    %v216 = vpop.xlane.xlu0 %215
    %v217 = vadd.f32 %v212, %v216
    %vm218 = vcmask 1024
    %219 = vst.msk [vmem:[#allocation3] sm:$0x3] %vm218, %v217
    // Predicated region
    $region38: #{tpu_custom_call.1} parent=1 // pred_check
      %p220 = pneg %p125
    $region39: #{tpu_custom_call.1} parent=1 // pred_check_branch
      %222 = sbr.rel (%p220) target = $region41
    $region40: #{tpu_custom_call.1} parent=1 // pred_region
      %v223 = vld [vmem:[#allocation2] sm:$0x3]
      %v224 = vld [vmem:[#allocation3] sm:$0x3]
      %v225 = vmax.f32 %v224, 1.0
      %227 = vset.pattern.permute.xlu0 0
      %228 = vperm.xlu0 %227, %v225
      %v229 = vpop.permute.xlu0 %228
      %v231 = vrcp.pop %v229
      %v232 = vmul.f32 %v223, %v231
      %v233 = vld [vmem:[%s6] sm:$0xff]
      %v234 = vld [vmem:[%s6 + $0x8] sm:$0xff]
      %v235 = vld [vmem:[%s6 + $0x10] sm:$0xff]
      %v236 = vld [vmem:[%s6 + $0x18] sm:$0xff]
      %v237 = vld [vmem:[%s7] sm:$0x1]
      %v239 = vlaneseq
      %v240 = vshrl.u32 %v239, 7
      %v241 = vsub.s32 0, %v240
      %v242 = vrot.slane %v237, %v241
      %v245 = vsel %vm63, %v232, 0
      %247 = vmatprep.subr.mxu0 0.0
      %248 = vmatpush1.msra.mxu0 %v233
      %249 = vmatprep.subr.mxu0 0.0
      %250 = vmatpush1.msra.mxu0 %v234
      %251 = vmatprep.subr.mxu0 0.0
      %252 = vmatpush1.msra.mxu0 %v235
      %253 = vmatprep.subr.mxu0 0.0
      %254 = vmatpush1.msra.mxu0 %v236
      %255 = vmatprep.subr.mxu0 0.0
      %256 = vmatpush1.msra.mxu0 0.0
      %257 = vmatprep.subr.mxu0 0.0
      %258 = vmatpush1.msra.mxu0 0.0
      %259 = vmatprep.subr.mxu0 0.0
      %260 = vmatpush1.msra.mxu0 0.0
      %261 = vmatprep.subr.mxu0 0.0
      %262 = vmatpush1.msra.mxu0 0.0
      %263 = vmatprep.subr.mxu0 0.0
      %264 = vmatpush1.msra.mxu0 0.0
      %265 = vmatprep.subr.mxu0 0.0
      %266 = vmatpush1.msra.mxu0 0.0
      %267 = vmatprep.subr.mxu0 0.0
      %268 = vmatpush1.msra.mxu0 0.0
      %269 = vmatprep.subr.mxu0 0.0
      %270 = vmatpush1.msra.mxu0 0.0
      %271 = vmatprep.subr.mxu0 0.0
      %272 = vmatpush1.msra.mxu0 0.0
      %273 = vmatprep.subr.mxu0 0.0
      %274 = vmatpush1.msra.mxu0 0.0
      %275 = vmatprep.subr.mxu0 0.0
      %276 = vmatpush1.msra.mxu0 0.0
      %277 = vmatprep.subr.mxu0 0.0
      %278 = vmatpush1.msra.mxu0 0.0
      %279 = vmatprep.subr.mxu0 0.0
      %280 = vmatpush1.msra.mxu0 0.0
      %281 = vmatprep.subr.mxu0 0.0
      %282 = vmatpush1.msra.mxu0 0.0
      %283 = vmatprep.subr.mxu0 0.0
      %284 = vmatpush1.msra.mxu0 0.0
      %285 = vmatprep.subr.mxu0 0.0
      %286 = vmatpush1.msra.mxu0 0.0
      %287 = vmatprep.subr.mxu0 0.0
      %288 = vmatpush1.msra.mxu0 0.0
      %289 = vmatprep.subr.mxu0 0.0
      %290 = vmatpush1.msra.mxu0 0.0
      %291 = vmatprep.subr.mxu0 0.0
      %292 = vmatpush1.msra.mxu0 0.0
      %293 = vmatprep.subr.mxu0 0.0
      %294 = vmatpush1.msra.mxu0 0.0
      %295 = vmatprep.subr.mxu0 0.0
      %296 = vmatpush1.msra.mxu0 0.0
      %297 = vmatprep.subr.mxu0 0.0
      %298 = vmatpush1.msra.mxu0 0.0
      %299 = vmatprep.subr.mxu0 0.0
      %300 = vmatpush1.msra.mxu0 0.0
      %301 = vmatprep.subr.mxu0 0.0
      %302 = vmatpush1.msra.mxu0 0.0
      %303 = vmatprep.subr.mxu0 0.0
      %304 = vmatpush1.msra.mxu0 0.0
      %305 = vmatprep.subr.mxu0 0.0
      %306 = vmatpush1.msra.mxu0 0.0
      %307 = vmatprep.subr.mxu0 0.0
      %308 = vmatpush1.msra.mxu0 0.0
      %309 = vmatprep.subr.mxu0 0.0
      %310 = vmatpush1.msra.mxu0 0.0
      %311 = vmatprep.mubr.f32.mxu0 0.0
      %312 = vmatmul.mubr.f32.gmra.mrb[0].mxu0 %v245
      %v313 = vpop.f32.mrb[0].mxu0
      %v314 = vadd.f32 %v242, %v313
      %v315 = vpop.f32.mrb[0].mxu0
      %316 = vdwg.mxu0
      %317 = vst [vmem:[#allocation4] sm:$0x3] %v314
    $region41: #{tpu_custom_call.1} parent=1 // pred_fallthru
      _
    // Predicated region
    $region42: #{tpu_custom_call.1} parent=1 // pred_check
      _
    $region43: #{tpu_custom_call.1} parent=1 // pred_check_branch
      %319 = sbr.rel (0) target = $region45
    $region44: #{tpu_custom_call.1} parent=1 // pred_region
      _
    $region45: #{tpu_custom_call.1} parent=1 // pred_fallthru
      _
    // Predicated region
    $region46: #{tpu_custom_call.1} parent=1 // pred_check
      _
    $region47: #{tpu_custom_call.1} parent=1 // pred_check_branch
      %321 = sbr.rel (0) target = $region49
    $region48: #{tpu_custom_call.1} parent=1 // pred_region
      %s323 = ssub.s32 32, 32
      %324 = vsyncadd [#allocation5], %s323
      %s326 = sshll.u32 [#allocation4], 4
      %s327 = int_to_ptr.vmem [resolvable:$true] %s326
      %329 = dma.vmem_to_hbm [thread:$0]  %s327, 32, %s9, [#allocation5]
    $region49: #{tpu_custom_call.1} parent=1 // pred_fallthru
      _
    // Predicated region
    $region50: #{tpu_custom_call.1} parent=1 // pred_check
      _
    $region51: #{tpu_custom_call.1} parent=1 // pred_check_branch
      %331 = sbr.rel (0) target = $region53
    $region52: #{tpu_custom_call.1} parent=1 // pred_region
      _
    $region53: #{tpu_custom_call.1} parent=1 // pred_fallthru
      _
    // Predicated region
    $region54: #{tpu_custom_call.1} parent=1 // pred_check
      _
    $region55: #{tpu_custom_call.1} parent=1 // pred_check_branch
      %333 = sbr.rel (0) target = $region57
    $region56: #{tpu_custom_call.1} parent=1 // pred_region
      %334 = dma.done [#allocation5], 32
    $region57: #{tpu_custom_call.1} parent=1 // pred_fallthru
      _
    %335 = vsyncpa [#allocation5], 1

</llo_original>
